<compile_context>
chip_gen: v6e
topology: v6e:2x2x1
jax: 0.10.0
libtpu: 0.0.40
codegen_flags: <defaults>
</compile_context>

<pallas_src>
import functools

import jax
import jax.numpy as jnp
from jax.experimental import pallas as pl
from jax.experimental.pallas import tpu as pltpu

BN_EPS = 1e-5
NEG_SLOPE = 0.2
_LANE = 128


def _round_up(x, m):
    return (x + m - 1) // m * m


@functools.lru_cache(maxsize=1)
def _vmem_limit_bytes():
    """Generation-aware scoped-VMEM limit: half of physical, capped at 64 MiB.

    v7x (64 MiB physical per TC) -> 32 MiB; v5e/v6e (128 MiB) -> 64 MiB.
    Falls back to a conservative 32 MiB if the hardware query fails.
    """
    phys = 64 * 1024 * 1024
    try:
        phys = int(pltpu.get_tpu_info().vmem_capacity_bytes)
    except Exception:
        pass
    return max(32 * 1024 * 1024, min(phys // 2, 64 * 1024 * 1024))


def _stats_kernel(x_ref, w_ref, stats_ref):
    """Pass 1: conv-as-matmul + per-batch per-channel sum / sum-of-squares.

    x_ref:     (K, tile_hw)   one batch element's HW tile (HW on the lane axis)
    w_ref:     (Cout, K)      resident across the whole grid
    stats_ref: (Cout, 2)      per-batch partials, accumulated over the hw axis
    """
    @pl.when(pl.program_id(1) == 0)
    def _():
        stats_ref[...] = jnp.zeros_like(stats_ref)

    y = jnp.dot(w_ref[...], x_ref[...], preferred_element_type=jnp.float32)
    # Lane-axis (XLU) reductions; single combined read-modify-write of the
    # resident (Cout, 2) accumulator block.
    s1 = jnp.sum(y, axis=-1, keepdims=True)
    s2 = jnp.sum(y * y, axis=-1, keepdims=True)
    col = jax.lax.broadcasted_iota(jnp.int32, stats_ref.shape, 1)
    stats_ref[...] += jnp.where(col == 0, s1, s2)
    # TODO(synk): for activations with a large per-channel mean, accumulate
    # around a cheap per-channel shift (or Welford) to avoid E[y^2]-E[y]^2
    # cancellation; with the cancelled conv bias it is not needed here.


def _apply_kernel(x_ref, w_ref, scale_ref, shift_ref, o_ref):
    """Pass 2: conv-as-matmul + folded BN affine (one FMA) + LeakyReLU(0.2)."""
    y = jnp.dot(w_ref[...], x_ref[...], preferred_element_type=jnp.float32)
    y = y * scale_ref[...] + shift_ref[...]
    o_ref[...] = jnp.where(y >= 0, y, NEG_SLOPE * y).astype(o_ref.dtype)


def _patches_nchw(x_nchw, kh, kw, stride, pad):
    """(N, Cin, H, W) -> (N, kh*kw*Cin, out_h*out_w) patch matrix (no transpose).

    K ordering is (kh, kw, Cin) to match w.transpose(0, 2, 3, 1).reshape(Cout, K).
    """
    # TODO(synk): for kh*kw > 1 this still materializes the patch matrix in HBM
    # (kh*kw x read amplification); an in-kernel shifted-window DMA
    # accumulation over a kh*kw "arbitrary" grid axis would remove it.
    if pad:
        x_nchw = jnp.pad(x_nchw, ((0, 0), (0, 0), (pad, pad), (pad, pad)))
    n, c, hp, wp = x_nchw.shape
    out_h = (hp - kh) // stride + 1
    out_w = (wp - kw) // stride + 1
    slabs = []
    for i in range(kh):
        for j in range(kw):
            slabs.append(x_nchw[:, :, i:i + stride * out_h:stride,
                                j:j + stride * out_w:stride])
    x_k = jnp.concatenate(slabs, axis=1)  # (N, kh*kw*Cin, out_h, out_w)
    return x_k.reshape(n, kh * kw * c, out_h * out_w), out_h, out_w


@functools.partial(
    jax.jit,
    static_argnames=("conv_k", "conv_stride", "conv_pad", "tile_hw",
                     "compute_dtype", "out_dtype"))
def conv_block_forward(x_nchw, w, b, gamma, beta, *, conv_k, conv_stride,
                       conv_pad, tile_hw=None, compute_dtype=jnp.bfloat16,
                       out_dtype=None):
    """x_nchw: (N, Cin, H, W); w: (Cout, Cin, kh, kw); b/gamma/beta: (Cout,)."""
    # The conv bias is exactly cancelled by the training-mode BN mean
    # subtraction, so it is intentionally not fed to the kernels.
    del b

    n, cin, h, w_in = x_nchw.shape
    cout = w.shape[0]
    out_dtype = x_nchw.dtype if out_dtype is None else out_dtype

    if conv_k == 1 and conv_stride == 1 and conv_pad == 0:
        # 1x1 conv fast path: (N, Cin, H*W) view is a free contiguous reshape.
        out_h, out_w = h, w_in
        x_k = x_nchw.reshape(n, cin, h * w_in)
        w_t = w.reshape(cout, cin)
    else:
        x_k, out_h, out_w = _patches_nchw(x_nchw, conv_k, conv_k, conv_stride,
                                          conv_pad)
        w_t = jnp.transpose(w, (0, 2, 3, 1)).reshape(cout, conv_k * conv_k * cin)

    k_dim = int(x_k.shape[1])
    hw = out_h * out_w
    m = n * hw                          # true element count for the BN stats

    in_item = jnp.dtype(compute_dtype).itemsize
    out_item = jnp.dtype(out_dtype).itemsize

    # ---- tile sizing: lane-dense HW tiles under a generation-aware VMEM
    # budget.  Bytes-per-lane includes sublane padding (rows pad to a full
    # 32-byte sublane) and double-buffering of the streamed input and output.
    vmem_cap = _vmem_limit_bytes()
    if tile_hw is None:
        per_lane = (2 * _round_up(k_dim * in_item, 32)     # x, double-buffered
                    + 2 * _round_up(cout * out_item, 32)   # out, double-buffered
                    + 2 * _round_up(cout * 4, 32))         # f32 intermediates
        budget = (vmem_cap * 3) // 4                       # leave headroom
        tile_hw = max(_LANE, min(65536, budget // per_lane))
        tile_hw = (tile_hw // _LANE) * _LANE
    tile_hw = min(tile_hw, _round_up(hw, _LANE))
    hw_pad = _round_up(hw, tile_hw)
    if hw_pad != hw:
        # Zero columns give y == 0 exactly (no conv bias), so sums stay exact
        # and we divide by the true m below.
        x_k = jnp.pad(x_k, ((0, 0), (0, 0), (0, hw_pad - hw)))
    num_tiles = hw_pad // tile_hw

    x_c = x_k.astype(compute_dtype)
    w_f32 = w_t.astype(jnp.float32)
    w_c = w_f32.astype(compute_dtype)

    matmul_flops = 2 * n * hw_pad * k_dim * cout
    stream_bytes = n * hw_pad * k_dim * in_item + cout * k_dim * in_item

    # ---- Pass 1: per-batch partial (sum, sum_sq) over all HW tiles.  The
    # batch axis is "parallel" (megacore-safe: cores own disjoint (Cout,2)
    # partial blocks); the HW axis is "arbitrary" so the block accumulates in
    # VMEM.  (For N == 1 this pass runs on a single core.)
    stats = pl.pallas_call(
        _stats_kernel,
        out_shape=jax.ShapeDtypeStruct((n, cout, 2), jnp.float32),
        grid=(n, num_tiles),
        in_specs=[
            pl.BlockSpec((pl.Squeezed(), k_dim, tile_hw),
                         lambda bi, ti: (bi, 0, ti)),
            pl.BlockSpec((cout, k_dim), lambda bi, ti: (0, 0)),
        ],
        out_specs=pl.BlockSpec((pl.Squeezed(), cout, 2),
                               lambda bi, ti: (bi, 0, 0)),
        compiler_params=pltpu.CompilerParams(
            dimension_semantics=("parallel", "arbitrary"),
            vmem_limit_bytes=vmem_cap),
        cost_estimate=pl.CostEstimate(
            flops=matmul_flops + 3 * n * hw_pad * cout,
            transcendentals=0,
            bytes_accessed=stream_bytes + 4 * n * cout * 2),
    )(x_c, w_c)

    # Fold training-mode BN (biased variance) into per-channel scale / shift
    # on the host from the GLOBAL statistics (tiny (N, Cout, 2) -> (Cout,) ops).
    sums = jnp.sum(stats, axis=0)                      # (Cout, 2)
    mean = sums[:, 0] / m
    var = sums[:, 1] / m - mean * mean
    scale = gamma.astype(jnp.float32) * jax.lax.rsqrt(var + BN_EPS)
    shift = beta.astype(jnp.float32) - mean * scale

    # ---- Pass 2: conv + BN affine + LeakyReLU, fully parallel over (batch, HW).
    out_flat = pl.pallas_call(
        _apply_kernel,
        out_shape=jax.ShapeDtypeStruct((n, cout, hw_pad), out_dtype),
        grid=(n, num_tiles),
        in_specs=[
            pl.BlockSpec((pl.Squeezed(), k_dim, tile_hw),
                         lambda bi, ti: (bi, 0, ti)),
            pl.BlockSpec((cout, k_dim), lambda bi, ti: (0, 0)),
            pl.BlockSpec((cout, 1), lambda bi, ti: (0, 0)),
            pl.BlockSpec((cout, 1), lambda bi, ti: (0, 0)),
        ],
        out_specs=pl.BlockSpec((pl.Squeezed(), cout, tile_hw),
                               lambda bi, ti: (bi, 0, ti)),
        compiler_params=pltpu.CompilerParams(
            dimension_semantics=("parallel", "parallel"),
            vmem_limit_bytes=vmem_cap),
        cost_estimate=pl.CostEstimate(
            flops=matmul_flops + 3 * n * hw_pad * cout,
            transcendentals=0,
            bytes_accessed=stream_bytes + n * hw_pad * cout * out_item),
    )(x_c, w_c, scale.reshape(cout, 1), shift.reshape(cout, 1))

    if hw_pad != hw:
        out_flat = out_flat[:, :, :hw]
    # Free contiguous reshape back to NCHW — no transpose.
    return out_flat.reshape(n, cout, out_h, out_w)


def _reference(x, w, b, gamma, beta, conv_k, conv_stride, conv_pad):
    """Pure-JAX reference: Conv2d (with bias) + training-mode BN + LeakyReLU."""
    y = jax.lax.conv_general_dilated(
        x.astype(jnp.float32), w.astype(jnp.float32),
        window_strides=(conv_stride, conv_stride),
        padding=[(conv_pad, conv_pad), (conv_pad, conv_pad)],
        dimension_numbers=("NCHW", "OIHW", "NCHW"))
    y = y + b.reshape(1, -1, 1, 1).astype(jnp.float32)
    mean = jnp.mean(y, axis=(0, 2, 3), keepdims=True)
    var = jnp.mean((y - mean) ** 2, axis=(0, 2, 3), keepdims=True)
    y = (y - mean) * jax.lax.rsqrt(var + BN_EPS)
    y = y * gamma.reshape(1, -1, 1, 1) + beta.reshape(1, -1, 1, 1)
    return jnp.where(y >= 0, y, NEG_SLOPE * y)


if __name__ == "__main__":
    # ConvBlock(in_channels=4, out_channels=8, kernel_size=3, stride=1,
    #           padding=1, bias=False)
    # -> effective conv (positional-arg shift in the PyTorch module):
    #    Conv2d(4, 8, kernel_size=1, stride=1, padding=0, bias=True).
    in_channels, out_channels = 4, 8
    conv_k, conv_stride, conv_pad = 1, 1, 0

    key = jax.random.PRNGKey(0)
    kx, kw, kb, kg, kbeta = jax.random.split(key, 5)

    x = jax.random.normal(kx, (2, in_channels, 16, 16), dtype=jnp.float32)
    w = jax.random.normal(
        kw, (out_channels, in_channels, conv_k, conv_k), dtype=jnp.float32) * 0.1
    b = jax.random.normal(kb, (out_channels,), dtype=jnp.float32) * 0.1
    gamma = 1.0 + 0.1 * jax.random.normal(kg, (out_channels,), dtype=jnp.float32)
    beta = 0.1 * jax.random.normal(kbeta, (out_channels,), dtype=jnp.float32)

    ref = _reference(x, w, b, gamma, beta, conv_k, conv_stride, conv_pad)

    # 1) f32 streaming with a small tile (H*W = 256 -> 2 tiles per batch elem)
    #    to exercise cross-tile / cross-batch BN stats accumulation tightly.
    out_f32 = conv_block_forward(
        x, w, b, gamma, beta, conv_k=conv_k, conv_stride=conv_stride,
        conv_pad=conv_pad, tile_hw=128, compute_dtype=jnp.float32)
    out_f32 = jax.block_until_ready(out_f32)
    assert out_f32.shape == (2, out_channels, 16, 16), out_f32.shape
    assert jnp.allclose(out_f32, ref, atol=5e-4, rtol=5e-4), (
        float(jnp.max(jnp.abs(out_f32 - ref))))

    # 2) default performance configuration: bf16 streaming + auto tile sizing.
    #    Compare against a reference fed the same bf16-rounded x / w so only
    #    the kernel's f32 accumulation / stats-fold differences remain.
    out_bf16 = conv_block_forward(
        x, w, b, gamma, beta, conv_k=conv_k, conv_stride=conv_stride,
        conv_pad=conv_pad)
    out_bf16 = jax.block_until_ready(out_bf16)
    ref_bf16 = _reference(
        x.astype(jnp.bfloat16).astype(jnp.float32),
        w.astype(jnp.bfloat16).astype(jnp.float32),
        b, gamma, beta, conv_k, conv_stride, conv_pad)
    assert out_bf16.shape == (2, out_channels, 16, 16), out_bf16.shape
    assert jnp.allclose(out_bf16, ref_bf16, atol=2e-3, rtol=2e-3), (
        float(jnp.max(jnp.abs(out_bf16 - ref_bf16))))

    print("KERNEL_OK")
</pallas_src>

<mosaic_0001>
module attributes {stable_mosaic.version = 11 : i64} {
  func.func @_stats_kernel(%arg0: i32, %arg1: i32, %arg2: memref<1x4x128xf32, #tpu.memory_space<vmem>>, %arg3: memref<8x4xf32, #tpu.memory_space<vmem>>, %arg4: memref<1x8x2xf32, #tpu.memory_space<vmem>>) attributes {dimension_semantics = [#tpu.dimension_semantics<parallel>, #tpu.dimension_semantics<arbitrary>], iteration_bounds = array<i64: 2, 2>, scalar_prefetch = 0 : i64, scratch_operands = 0 : i64, tpu.core_type = #tpu.core_type<tc>, window_params = [{transform_indices = @transform_0, window_bounds = array<i64: 1, 4, 128>}, {pipeline_mode = #tpu.pipeline_mode<synchronous>, transform_indices = @transform_1, window_bounds = array<i64: 8, 4>}, {transform_indices = @transform_2, window_bounds = array<i64: 1, 8, 2>}]} {
    %c0_i32 = arith.constant 0 : i32
    %0 = arith.cmpi eq, %arg1, %c0_i32 : i32
    %1 = arith.extui %0 : i1 to i32
    %c0_i32_0 = arith.constant 0 : i32
    %2 = arith.cmpi ne, %1, %c0_i32_0 : i32
    scf.if %2 {
      %cst_14 = arith.constant 0.000000e+00 : f32
      %26 = vector.broadcast %cst_14 : f32 to vector<8x2xf32>
      %c0_15 = arith.constant 0 : index
      %c0_16 = arith.constant 0 : index
      %c0_17 = arith.constant 0 : index
      %27 = vector.load %arg4[%c0_15, %c0_16, %c0_17] : memref<1x8x2xf32, #tpu.memory_space<vmem>>, vector<1x8x2xf32>
      %28 = vector.shape_cast %27 : vector<1x8x2xf32> to vector<8x2xf32>
      %29 = vector.shape_cast %26 : vector<8x2xf32> to vector<1x8x2xf32>
      tpu.vector_store %arg4[%c0_15, %c0_16, %c0_17], %29 {strides = array<i32>} : memref<1x8x2xf32, #tpu.memory_space<vmem>>, vector<1x8x2xf32>,
    } else {
    }
    %c0 = arith.constant 0 : index
    %c0_1 = arith.constant 0 : index
    %3 = vector.load %arg3[%c0, %c0_1] : memref<8x4xf32, #tpu.memory_space<vmem>>, vector<8x4xf32>
    %c0_2 = arith.constant 0 : index
    %c0_3 = arith.constant 0 : index
    %c0_4 = arith.constant 0 : index
    %4 = vector.load %arg2[%c0_2, %c0_3, %c0_4] : memref<1x4x128xf32, #tpu.memory_space<vmem>>, vector<1x4x128xf32>
    %5 = vector.shape_cast %4 : vector<1x4x128xf32> to vector<4x128xf32>
    %cst = arith.constant dense<0.000000e+00> : vector<8x128xf32>
    %6 = tpu.matmul %3, %5, %cst {dimension_numbers = #tpu.dot_dimension_numbers<[1], [0], [0], [1], [0, 0, 1, 1], [], []>} : vector<8x4xf32>, vector<4x128xf32>, vector<8x128xf32> -> vector<8x128xf32>
    %cst_5 = arith.constant dense<0.000000e+00> : vector<8xf32>
    %7 = vector.multi_reduction <add>, %6, %cst_5 [1] : vector<8x128xf32> to vector<8xf32>
    %8 = vector.shape_cast %7 : vector<8xf32> to vector<8x1xf32>
    %9 = arith.mulf %6, %6 : vector<8x128xf32>
    %cst_6 = arith.constant dense<0.000000e+00> : vector<8xf32>
    %10 = vector.multi_reduction <add>, %9, %cst_6 [1] : vector<8x128xf32> to vector<8xf32>
    %11 = vector.shape_cast %10 : vector<8xf32> to vector<8x1xf32>
    %12 = tpu.iota {dimensions = array<i32: 1>} : vector<8x2xi32>
    %c0_7 = arith.constant 0 : index
    %c0_8 = arith.constant 0 : index
    %c0_9 = arith.constant 0 : index
    %13 = vector.load %arg4[%c0_7, %c0_8, %c0_9] : memref<1x8x2xf32, #tpu.memory_space<vmem>>, vector<1x8x2xf32>
    %14 = vector.shape_cast %13 : vector<1x8x2xf32> to vector<8x2xf32>
    %c0_i32_10 = arith.constant 0 : i32
    %15 = vector.broadcast %c0_i32_10 : i32 to vector<8x2xi32>
    %16 = arith.cmpi eq, %12, %15 : vector<8x2xi32>
    %17 = vector.shape_cast %8 : vector<8x1xf32> to vector<8x1xf32>
    %18 = vector.broadcast %17 : vector<8x1xf32> to vector<8x2xf32>
    %19 = vector.shape_cast %11 : vector<8x1xf32> to vector<8x1xf32>
    %20 = vector.broadcast %19 : vector<8x1xf32> to vector<8x2xf32>
    %21 = arith.select %16, %18, %20 : vector<8x2xi1>, vector<8x2xf32>
    %22 = arith.addf %14, %21 : vector<8x2xf32>
    %c0_11 = arith.constant 0 : index
    %c0_12 = arith.constant 0 : index
    %c0_13 = arith.constant 0 : index
    %23 = vector.load %arg4[%c0_11, %c0_12, %c0_13] : memref<1x8x2xf32, #tpu.memory_space<vmem>>, vector<1x8x2xf32>
    %24 = vector.shape_cast %23 : vector<1x8x2xf32> to vector<8x2xf32>
    %25 = vector.shape_cast %22 : vector<8x2xf32> to vector<1x8x2xf32>
    tpu.vector_store %arg4[%c0_11, %c0_12, %c0_13], %25 {strides = array<i32>} : memref<1x8x2xf32, #tpu.memory_space<vmem>>, vector<1x8x2xf32>,
    return
  }
  func.func @transform_0(%arg0: i32, %arg1: i32) -> (i32, i32, i32) {
    %c0_i32 = arith.constant 0 : i32
    %c0_i32_0 = arith.constant 0 : i32
    return %arg0, %c0_i32, %arg1 : i32, i32, i32
  }
  func.func @transform_1(%arg0: i32, %arg1: i32) -> (i32, i32) {
    %c0_i32 = arith.constant 0 : i32
    %c0_i32_0 = arith.constant 0 : i32
    %c0_i32_1 = arith.constant 0 : i32
    return %c0_i32, %c0_i32_0 : i32, i32
  }
  func.func @transform_2(%arg0: i32, %arg1: i32) -> (i32, i32, i32) {
    %c0_i32 = arith.constant 0 : i32
    %c0_i32_0 = arith.constant 0 : i32
    %c0_i32_1 = arith.constant 0 : i32
    return %arg0, %c0_i32, %c0_i32_0 : i32, i32, i32
  }
}

module attributes {stable_mosaic.version = 11 : i64} {
  func.func @_apply_kernel(%arg0: i32, %arg1: i32, %arg2: memref<1x4x128xf32, #tpu.memory_space<vmem>>, %arg3: memref<8x4xf32, #tpu.memory_space<vmem>>, %arg4: memref<8x1xf32, #tpu.memory_space<vmem>>, %arg5: memref<8x1xf32, #tpu.memory_space<vmem>>, %arg6: memref<1x8x128xf32, #tpu.memory_space<vmem>>) attributes {dimension_semantics = [#tpu.dimension_semantics<parallel>, #tpu.dimension_semantics<parallel>], iteration_bounds = array<i64: 2, 2>, scalar_prefetch = 0 : i64, scratch_operands = 0 : i64, tpu.core_type = #tpu.core_type<tc>, window_params = [{transform_indices = @transform_0, window_bounds = array<i64: 1, 4, 128>}, {pipeline_mode = #tpu.pipeline_mode<synchronous>, transform_indices = @transform_1, window_bounds = array<i64: 8, 4>}, {pipeline_mode = #tpu.pipeline_mode<synchronous>, transform_indices = @transform_2, window_bounds = array<i64: 8, 1>}, {pipeline_mode = #tpu.pipeline_mode<synchronous>, transform_indices = @transform_3, window_bounds = array<i64: 8, 1>}, {transform_indices = @transform_4, window_bounds = array<i64: 1, 8, 128>}]} {
    %c0 = arith.constant 0 : index
    %c0_0 = arith.constant 0 : index
    %0 = vector.load %arg3[%c0, %c0_0] : memref<8x4xf32, #tpu.memory_space<vmem>>, vector<8x4xf32>
    %c0_1 = arith.constant 0 : index
    %c0_2 = arith.constant 0 : index
    %c0_3 = arith.constant 0 : index
    %1 = vector.load %arg2[%c0_1, %c0_2, %c0_3] : memref<1x4x128xf32, #tpu.memory_space<vmem>>, vector<1x4x128xf32>
    %2 = vector.shape_cast %1 : vector<1x4x128xf32> to vector<4x128xf32>
    %cst = arith.constant dense<0.000000e+00> : vector<8x128xf32>
    %3 = tpu.matmul %0, %2, %cst {dimension_numbers = #tpu.dot_dimension_numbers<[1], [0], [0], [1], [0, 0, 1, 1], [], []>} : vector<8x4xf32>, vector<4x128xf32>, vector<8x128xf32> -> vector<8x128xf32>
    %c0_4 = arith.constant 0 : index
    %c0_5 = arith.constant 0 : index
    %4 = vector.load %arg4[%c0_4, %c0_5] : memref<8x1xf32, #tpu.memory_space<vmem>>, vector<8x1xf32>
    %5 = vector.broadcast %4 : vector<8x1xf32> to vector<8x128xf32>
    %6 = arith.mulf %3, %5 : vector<8x128xf32>
    %c0_6 = arith.constant 0 : index
    %c0_7 = arith.constant 0 : index
    %7 = vector.load %arg5[%c0_6, %c0_7] : memref<8x1xf32, #tpu.memory_space<vmem>>, vector<8x1xf32>
    %8 = vector.broadcast %7 : vector<8x1xf32> to vector<8x128xf32>
    %9 = arith.addf %6, %8 : vector<8x128xf32>
    %cst_8 = arith.constant 0.000000e+00 : f32
    %10 = vector.broadcast %cst_8 : f32 to vector<8x128xf32>
    %11 = arith.cmpf oge, %9, %10 : vector<8x128xf32>
    %cst_9 = arith.constant 2.000000e-01 : f32
    %12 = vector.broadcast %cst_9 : f32 to vector<8x128xf32>
    %13 = arith.mulf %12, %9 : vector<8x128xf32>
    %14 = arith.select %11, %9, %13 : vector<8x128xi1>, vector<8x128xf32>
    %c0_10 = arith.constant 0 : index
    %c0_11 = arith.constant 0 : index
    %c0_12 = arith.constant 0 : index
    %15 = vector.load %arg6[%c0_10, %c0_11, %c0_12] : memref<1x8x128xf32, #tpu.memory_space<vmem>>, vector<1x8x128xf32>
    %16 = vector.shape_cast %15 : vector<1x8x128xf32> to vector<8x128xf32>
    %17 = vector.shape_cast %14 : vector<8x128xf32> to vector<1x8x128xf32>
    tpu.vector_store %arg6[%c0_10, %c0_11, %c0_12], %17 {strides = array<i32>} : memref<1x8x128xf32, #tpu.memory_space<vmem>>, vector<1x8x128xf32>,
    return
  }
  func.func @transform_0(%arg0: i32, %arg1: i32) -> (i32, i32, i32) {
    %c0_i32 = arith.constant 0 : i32
    %c0_i32_0 = arith.constant 0 : i32
    return %arg0, %c0_i32, %arg1 : i32, i32, i32
  }
  func.func @transform_1(%arg0: i32, %arg1: i32) -> (i32, i32) {
    %c0_i32 = arith.constant 0 : i32
    %c0_i32_0 = arith.constant 0 : i32
    %c0_i32_1 = arith.constant 0 : i32
    return %c0_i32, %c0_i32_0 : i32, i32
  }
  func.func @transform_2(%arg0: i32, %arg1: i32) -> (i32, i32) {
    %c0_i32 = arith.constant 0 : i32
    %c0_i32_0 = arith.constant 0 : i32
    %c0_i32_1 = arith.constant 0 : i32
    return %c0_i32, %c0_i32_0 : i32, i32
  }
  func.func @transform_3(%arg0: i32, %arg1: i32) -> (i32, i32) {
    %c0_i32 = arith.constant 0 : i32
    %c0_i32_0 = arith.constant 0 : i32
    %c0_i32_1 = arith.constant 0 : i32
    return %c0_i32, %c0_i32_0 : i32, i32
  }
  func.func @transform_4(%arg0: i32, %arg1: i32) -> (i32, i32, i32) {
    %c0_i32 = arith.constant 0 : i32
    %c0_i32_0 = arith.constant 0 : i32
    return %arg0, %c0_i32, %arg1 : i32, i32, i32
  }
}

</mosaic_0001>

<llo_original>
// kernel: conv_block_forward.2
$region0: #{conv_block_forward.2}
  #allocation0 [shape = 'u32[]', space=smem, size = 0x4, offset = 0x4, fixed_abs, tag = 'smem constant byte address 0x4 - core index']
  #allocation1 [shape = 'u32[144,128]{1,0:T(1,128)}', space=vmem, size = 0x12000, scoped, tag = 'internal scratch']
  %s0 = inlined_call_operand.vmem [shape: f32[2,4,256], index: 0, kind: input, shape index: {}]
  %s1 = inlined_call_operand.vmem [shape: f32[8,4], index: 1, kind: input, shape index: {}]
  %s2 = inlined_call_operand.vmem [shape: f32[2,8,2], index: 2, kind: output, shape index: {}]
  %s3 = sld [smem:[#allocation0]]
  $region45: #{conv_block_forward.2} parent=0
    _
  %s5 = ssub.s32 1, %s3
  %s6 = scalar_select 0, %s5, %s3
  loop: start=0, step=1, limit=6
  $region2: #{conv_block_forward.2} parent=0 // loop_pre_header
    _
  $region3: #{conv_block_forward.2} parent=0 // loop_header
    %s8 = sphi 0, %s12
    %p9 = scmp.ge.s32.totalorder %s8, 6
    %s15 = sphi 0, %s27
    %s16 = sphi 0, %s23
    %s17 = sphi 0, %s15
    %s18 = sphi 0, %s16
    %s19 = sphi 0, %s17
    %s20 = sphi 0, %s18
    %s32 = sphi 0, %s34
    %s35 = sphi 0, %s32
    %s36 = sphi 0, %s35
    %s52 = sphi 0, %s36
    %s56 = sphi 0, %s56
    %s58 = sphi 0, %s56
    %s59 = sphi 0, %s58
    %s73 = sphi 0, %s59
    %s79 = sphi 0, %s81
    %s82 = sphi 0, %s79
    %s83 = sphi 0, %s82
    %s99 = sphi 0, %s83
  $region4: #{conv_block_forward.2} parent=0 // loop_header_branch
    %11 = sbr.rel (%p9) target = $region8
  $region5: #{conv_block_forward.2} parent=0 // loop_body
    %s13 = ssub.s32 %s8, 1
    %s14 = ssub.s32 %s8, 2
    %s21 = sadd.s32 1, %s16
    %p22 = scmp.ge.s32.totalorder %s21, 2
    %s23 = scalar_select %p22, 0, %s21
    %s24 = sadd.s32 1, %s15
    %s25 = scalar_select %p22, %s24, %s15
    %p26 = scmp.ge.s32.totalorder %s25, 2
    %s27 = scalar_select %p26, 0, %s25
    %s28 = ssub.s32 %s15, %s27
    %s29 = ssub.s32 %s16, %s23
    %s30 = sor.u32 %s28, %s29
    %p31 = scmp.eq.s32.totalorder %s30, 0
    %s33 = sadd.s32 %s32, 1
    %s34 = scalar_select %p31, %s32, %s33
    %p37 = pneg %p31
    %p38 = scmp.eq.s32.totalorder %s8, 3
    %p39 = por %p37, %p38
    %p40 = scmp.ne.s32.totalorder %s32, %s35
    %p41 = scmp.eq.s32.totalorder %s8, 0
    %p42 = por %p40, %p41
    %p43 = scmp.ne.s32.totalorder %s32, %s35
    %p44 = scmp.eq.s32.totalorder %s13, 3
    %p45 = por %p43, %p44
    %p46 = scmp.ne.s32.totalorder %s35, %s36
    %p47 = scmp.eq.s32.totalorder %s13, 0
    %p48 = por %p46, %p47
    %p49 = scmp.ne.s32.totalorder %s35, %s36
    %p50 = scmp.eq.s32.totalorder %s14, 3
    %p51 = por %p49, %p50
    %p53 = scmp.ne.s32.totalorder %s36, %s52
    %p54 = scmp.eq.s32.totalorder %s14, 0
    %p55 = por %p53, %p54
    %s57 = sadd.s32 %s56, 1
    %p60 = scmp.eq.s32.totalorder %s8, 3
    %p61 = scmp.ne.s32.totalorder %s56, %s58
    %p62 = scmp.eq.s32.totalorder %s8, 0
    %p63 = por %p61, %p62
    %p64 = scmp.ne.s32.totalorder %s56, %s58
    %p65 = scmp.eq.s32.totalorder %s13, 3
    %p66 = por %p64, %p65
    %p67 = scmp.ne.s32.totalorder %s58, %s59
    %p68 = scmp.eq.s32.totalorder %s13, 0
    %p69 = por %p67, %p68
    %p70 = scmp.ne.s32.totalorder %s58, %s59
    %p71 = scmp.eq.s32.totalorder %s14, 3
    %p72 = por %p70, %p71
    %p74 = scmp.ne.s32.totalorder %s59, %s73
    %p75 = scmp.eq.s32.totalorder %s14, 0
    %p76 = por %p74, %p75
    %s77 = ssub.s32 %s15, %s27
    %p78 = scmp.eq.s32.totalorder %s77, 0
    %s80 = sadd.s32 %s79, 1
    %s81 = scalar_select %p78, %s79, %s80
    %p84 = pneg %p78
    %p85 = scmp.eq.s32.totalorder %s8, 3
    %p86 = por %p84, %p85
    %p87 = scmp.ne.s32.totalorder %s79, %s82
    %p88 = scmp.eq.s32.totalorder %s8, 0
    %p89 = por %p87, %p88
    %p90 = scmp.ne.s32.totalorder %s79, %s82
    %p91 = scmp.eq.s32.totalorder %s13, 3
    %p92 = por %p90, %p91
    %p93 = scmp.ne.s32.totalorder %s82, %s83
    %p94 = scmp.eq.s32.totalorder %s13, 0
    %p95 = por %p93, %p94
    %p96 = scmp.ne.s32.totalorder %s82, %s83
    %p97 = scmp.eq.s32.totalorder %s14, 3
    %p98 = por %p96, %p97
    %p100 = scmp.ne.s32.totalorder %s83, %s99
    %p101 = scmp.eq.s32.totalorder %s14, 0
    %p102 = por %p100, %p101
    %p103 = scmp.le.s32.totalorder 1, %s8
    %p104 = scmp.lt.s32.totalorder %s8, 5
    %p105 = pnand %p103, %p104
    %p106 = pneg %p105
    // Predicated region
    $region9: #{conv_block_forward.2} parent=5 // pred_check
      _
    $region10: #{conv_block_forward.2} parent=5 // pred_check_branch
      %108 = sbr.rel (%p105) target = $region12
    $region11: #{conv_block_forward.2} parent=5 // pred_region
      %s109 = ssub.s32 %s8, 1
      // Predicated region
      $region13: #{conv_block_forward.2} parent=11 // pred_check
        %p110 = pneg %p69
      $region14: #{conv_block_forward.2} parent=11 // pred_check_branch
        %112 = sbr.rel (%p110) target = $region16
      $region15: #{conv_block_forward.2} parent=11 // pred_region
        _
      $region16: #{conv_block_forward.2} parent=11 // pred_fallthru
        _
    $region12: #{conv_block_forward.2} parent=5 // pred_fallthru
      _
    %p113 = scmp.lt.s32.totalorder %s8, 4
    // Predicated region
    $region17: #{conv_block_forward.2} parent=5 // pred_check
      %p114 = pneg %p113
    $region18: #{conv_block_forward.2} parent=5 // pred_check_branch
      %116 = sbr.rel (%p114) target = $region20
    $region19: #{conv_block_forward.2} parent=5 // pred_region
      // Predicated region
      $region21: #{conv_block_forward.2} parent=19 // pred_check
        %p117 = pneg %p42
      $region22: #{conv_block_forward.2} parent=19 // pred_check_branch
        %119 = sbr.rel (%p117) target = $region24
      $region23: #{conv_block_forward.2} parent=19 // pred_region
        %p120 = scmp.lt.s32.totalorder %s15, 1
        %s121 = scalar_select %p120, %s15, 1
        %p122 = scmp.lt.s32.totalorder %s16, 1
        %s123 = scalar_select %p122, %s16, 1
        %s124 = smul.addr %s121, 2
        %s125 = sadd.s32 %s123, %s124
        %s126 = smul.addr %s125, 4
        %s127 = scalar_lea.vmem %s0, %s126
      $region24: #{conv_block_forward.2} parent=19 // pred_fallthru
        _
    $region20: #{conv_block_forward.2} parent=5 // pred_fallthru
      _
    %p128 = scmp.le.s32.totalorder 1, %s8
    %p129 = scmp.lt.s32.totalorder %s8, 5
    %p130 = pnand %p128, %p129
    %p131 = pneg %p130
    // Predicated region
    $region25: #{conv_block_forward.2} parent=5 // pred_check
      _
    $region26: #{conv_block_forward.2} parent=5 // pred_check_branch
      %133 = sbr.rel (%p130) target = $region28
    $region27: #{conv_block_forward.2} parent=5 // pred_region
      %s134 = ssub.s32 %s8, 1
      %p135 = scmp.lt.s32.totalorder %s17, 1
      %s136 = scalar_select %p135, %s17, 1
      %p137 = scmp.lt.s32.totalorder %s18, 1
      %s138 = scalar_select %p137, %s18, 1
      %s139 = smul.addr %s136, 2
      %s140 = sadd.s32 %s138, %s139
      %s141 = smul.addr %s140, 4
      %s142 = scalar_lea.vmem %s0, %s141
      %p143 = pneg %p48
      %p144 = pneg %p45
      %p145 = pneg %p69
      %p146 = pneg %p66
      %p147 = pneg %p95
      %p148 = pneg %p92
      %p149 = scmp.lt.s32.totalorder %s17, 1
      %s150 = scalar_select %p149, %s17, 1
      %s151 = smul.addr %s150, 8
      %s152 = scalar_lea.vmem %s2, %s151
      %p153 = scmp.lt.s32.totalorder %s17, 1
      %s154 = scalar_select %p153, %s17, 1
      %p155 = scmp.lt.s32.totalorder %s18, 1
      %s156 = scalar_select %p155, %s18, 1
      %s157 = smul.addr %s154, 2
      %s158 = sadd.s32 %s156, %s157
      %s159 = smul.addr %s158, 4
      %s160 = scalar_lea.vmem %s0, %s159
      %p161 = scmp.lt.s32.totalorder %s17, 1
      %s162 = scalar_select %p161, %s17, 1
      %s163 = smul.addr %s162, 8
      %s164 = scalar_lea.vmem %s2, %s163
      %p165 = scmp.eq.s32.totalorder %s18, 0
      // Predicated region
      $region29: #{conv_block_forward.2} parent=27 // pred_check
        %p166 = pneg %p165
      $region30: #{conv_block_forward.2} parent=27 // pred_check_branch
        %168 = sbr.rel (%p166) target = $region32
      $region31: #{conv_block_forward.2} parent=27 // pred_region
        %vm169 = vcmask 15360
        %170 = vst.msk [vmem:[%s164] sm:$0xff] %vm169, 0.0
      $region32: #{conv_block_forward.2} parent=27 // pred_fallthru
        _
      %v171 = vld [vmem:[%s1] sm:$0xff]
      %v172 = vld [vmem:[%s160] sm:$0xf]
      %vm173 = vcmask 31744
      %v175 = vsel %vm173, %v171, 0
      %vm177 = vcmask 1043456
      %v179 = vsel %vm177, %v172, 0
      %181 = vmatprep.subr.mxu0 0.0
      %182 = vmatpush1.msra.mxu0 0.0
      %183 = vmatprep.subr.mxu0 0.0
      %184 = vmatpush1.msra.mxu0 0.0
      %185 = vmatprep.subr.mxu0 0.0
      %186 = vmatpush1.msra.mxu0 0.0
      %187 = vmatprep.subr.mxu0 0.0
      %188 = vmatpush1.msra.mxu0 0.0
      %189 = vmatprep.subr.mxu0 0.0
      %190 = vmatpush1.msra.mxu0 0.0
      %191 = vmatprep.subr.mxu0 0.0
      %192 = vmatpush1.msra.mxu0 0.0
      %193 = vmatprep.subr.mxu0 0.0
      %194 = vmatpush1.msra.mxu0 0.0
      %195 = vmatprep.subr.mxu0 0.0
      %196 = vmatpush1.msra.mxu0 0.0
      %197 = vmatprep.subr.mxu0 0.0
      %198 = vmatpush1.msra.mxu0 0.0
      %199 = vmatprep.subr.mxu0 0.0
      %200 = vmatpush1.msra.mxu0 0.0
      %201 = vmatprep.subr.mxu0 0.0
      %202 = vmatpush1.msra.mxu0 0.0
      %203 = vmatprep.subr.mxu0 0.0
      %204 = vmatpush1.msra.mxu0 0.0
      %205 = vmatprep.subr.mxu0 0.0
      %206 = vmatpush1.msra.mxu0 0.0
      %207 = vmatprep.subr.mxu0 0.0
      %208 = vmatpush1.msra.mxu0 0.0
      %209 = vmatprep.subr.mxu0 0.0
      %210 = vmatpush1.msra.mxu0 0.0
      %211 = vmatprep.subr.mxu0 0.0
      %212 = vmatpush1.msra.mxu0 %v179
      %213 = vmatprep.subr.mxu0 0.0
      %214 = vmatpush2.msra.mxu0 0.0
      %215 = vmatprep.subr.mxu0 0.0
      %216 = vmatpush2.msra.mxu0 0.0
      %217 = vmatprep.subr.mxu0 0.0
      %218 = vmatpush2.msra.mxu0 0.0
      %219 = vmatprep.subr.mxu0 0.0
      %220 = vmatpush2.msra.mxu0 0.0
      %221 = vmatprep.subr.mxu0 0.0
      %222 = vmatpush2.msra.mxu0 0.0
      %223 = vmatprep.subr.mxu0 0.0
      %224 = vmatpush2.msra.mxu0 0.0
      %225 = vmatprep.subr.mxu0 0.0
      %226 = vmatpush2.msra.mxu0 0.0
      %227 = vmatprep.subr.mxu0 0.0
      %228 = vmatpush2.msra.mxu0 0.0
      %229 = vmatprep.subr.mxu0 0.0
      %230 = vmatpush2.msra.mxu0 0.0
      %231 = vmatprep.subr.mxu0 0.0
      %232 = vmatpush2.msra.mxu0 0.0
      %233 = vmatprep.subr.mxu0 0.0
      %234 = vmatpush2.msra.mxu0 0.0
      %235 = vmatprep.subr.mxu0 0.0
      %236 = vmatpush2.msra.mxu0 0.0
      %237 = vmatprep.subr.mxu0 0.0
      %238 = vmatpush2.msra.mxu0 0.0
      %239 = vmatprep.subr.mxu0 0.0
      %240 = vmatpush2.msra.mxu0 0.0
      %241 = vmatprep.subr.mxu0 0.0
      %242 = vmatpush2.msra.mxu0 0.0
      %243 = vmatprep.subr.mxu0 0.0
      %244 = vmatpush2.msra.mxu0 0.0
      %245 = vmatprep.mubr.f32.mxu0 0.0
      %246 = vmatmul.mubr.f32.gmra.mxu0 %v175
      %v247 = vpop.f32.mrf.mxu0
      %v248 = vadd.f32 0.0, %v247
      %v249 = vpop.f32.mrf.mxu0
      %250 = vdwg.mxu0
      %251 = vadd.xlane.f32.xlu0 %v248
      %v252 = vpop.xlane.xlu0 %251
      %v253 = vmul.f32 %v248, %v248
      %254 = vadd.xlane.f32.xlu0 %v253
      %v255 = vpop.xlane.xlu0 %254
      %v256 = vlaneseq
      %v257 = vand.u32 %v256, 127
      %v258 = vld [vmem:[%s164] sm:$0xff]
      %vm259 = vcmp.eq.s32.totalorder %v257, 0
      %v260 = vsel %vm259, %v252, %v255
      %v261 = vadd.f32 %v258, %v260
      %vm262 = vcmask 15360
      %263 = vst.msk [vmem:[%s164] sm:$0xff] %vm262, %v261
      %p264 = scmp.lt.s32.totalorder %s17, 1
      %s265 = scalar_select %p264, %s17, 1
      %s266 = smul.addr %s265, 8
      %s267 = scalar_lea.vmem %s2, %s266
      // Predicated region
      $region33: #{conv_block_forward.2} parent=27 // pred_check
        %p268 = pneg %p92
      $region34: #{conv_block_forward.2} parent=27 // pred_check_branch
        %270 = sbr.rel (%p268) target = $region36
      $region35: #{conv_block_forward.2} parent=27 // pred_region
        _
      $region36: #{conv_block_forward.2} parent=27 // pred_fallthru
        _
    $region28: #{conv_block_forward.2} parent=5 // pred_fallthru
      _
    %p271 = scmp.le.s32.totalorder 2, %s8
    // Predicated region
    $region37: #{conv_block_forward.2} parent=5 // pred_check
      %p272 = pneg %p271
    $region38: #{conv_block_forward.2} parent=5 // pred_check_branch
      %274 = sbr.rel (%p272) target = $region40
    $region39: #{conv_block_forward.2} parent=5 // pred_region
      %s275 = ssub.s32 %s8, 2
      // Predicated region
      $region41: #{conv_block_forward.2} parent=39 // pred_check
        %p276 = pneg %p98
      $region42: #{conv_block_forward.2} parent=39 // pred_check_branch
        %278 = sbr.rel (%p276) target = $region44
      $region43: #{conv_block_forward.2} parent=39 // pred_region
        %p279 = scmp.lt.s32.totalorder %s19, 1
        %s280 = scalar_select %p279, %s19, 1
        %s281 = smul.addr %s280, 8
        %s282 = scalar_lea.vmem %s2, %s281
      $region44: #{conv_block_forward.2} parent=39 // pred_fallthru
        _
    $region40: #{conv_block_forward.2} parent=5 // pred_fallthru
      _
  $region6: #{conv_block_forward.2} parent=0 // loop_footer
    %s12 = sadd.s32 1, %s8
  $region7: #{conv_block_forward.2} parent=0 // loop_footer_branch
    %7 = sbr.rel target = $region3
  $region8: #{conv_block_forward.2} parent=0 // loop_exit
    _

// kernel: conv_block_forward.3
$region0: #{conv_block_forward.3}
  #allocation0 [shape = 'u32[]', space=smem, size = 0x4, offset = 0x4, fixed_abs, tag = 'smem constant byte address 0x4 - core index']
  #allocation1 [shape = 'u32[144,128]{1,0:T(1,128)}', space=vmem, size = 0x12000, scoped, tag = 'internal scratch']
  %s0 = inlined_call_operand.vmem [shape: f32[2,4,256], index: 0, kind: input, shape index: {}]
  %s1 = inlined_call_operand.vmem [shape: f32[8,4], index: 1, kind: input, shape index: {}]
  %s2 = inlined_call_operand.vmem [shape: f32[8,1], index: 2, kind: input, shape index: {}]
  %s3 = inlined_call_operand.vmem [shape: f32[8,1], index: 3, kind: input, shape index: {}]
  %s4 = inlined_call_operand.vmem [shape: f32[2,8,256], index: 4, kind: output, shape index: {}]
  %s5 = sld [smem:[#allocation0]]
  $region49: #{conv_block_forward.3} parent=0
    _
  %s7 = ssub.s32 1, %s5
  %s8 = scalar_select 0, %s7, %s5
  loop: start=0, step=1, limit=6
  $region2: #{conv_block_forward.3} parent=0 // loop_pre_header
    _
  $region3: #{conv_block_forward.3} parent=0 // loop_header
    %s10 = sphi 0, %s14
    %p11 = scmp.ge.s32.totalorder %s10, 6
    %s17 = sphi 0, %s29
    %s18 = sphi 0, %s25
    %s19 = sphi 0, %s17
    %s20 = sphi 0, %s18
    %s21 = sphi 0, %s19
    %s22 = sphi 0, %s20
    %s34 = sphi 0, %s36
    %s37 = sphi 0, %s34
    %s38 = sphi 0, %s37
    %s54 = sphi 0, %s38
    %s58 = sphi 0, %s58
    %s60 = sphi 0, %s58
    %s61 = sphi 0, %s60
    %s75 = sphi 0, %s61
    %s79 = sphi 0, %s79
    %s81 = sphi 0, %s79
    %s82 = sphi 0, %s81
    %s96 = sphi 0, %s82
    %s100 = sphi 0, %s100
    %s102 = sphi 0, %s100
    %s103 = sphi 0, %s102
    %s117 = sphi 0, %s103
    %s125 = sphi 0, %s127
    %s128 = sphi 0, %s125
    %s129 = sphi 0, %s128
    %s145 = sphi 0, %s129
  $region4: #{conv_block_forward.3} parent=0 // loop_header_branch
    %13 = sbr.rel (%p11) target = $region8
  $region5: #{conv_block_forward.3} parent=0 // loop_body
    %s15 = ssub.s32 %s10, 1
    %s16 = ssub.s32 %s10, 2
    %s23 = sadd.s32 1, %s18
    %p24 = scmp.ge.s32.totalorder %s23, 2
    %s25 = scalar_select %p24, 0, %s23
    %s26 = sadd.s32 1, %s17
    %s27 = scalar_select %p24, %s26, %s17
    %p28 = scmp.ge.s32.totalorder %s27, 2
    %s29 = scalar_select %p28, 0, %s27
    %s30 = ssub.s32 %s17, %s29
    %s31 = ssub.s32 %s18, %s25
    %s32 = sor.u32 %s30, %s31
    %p33 = scmp.eq.s32.totalorder %s32, 0
    %s35 = sadd.s32 %s34, 1
    %s36 = scalar_select %p33, %s34, %s35
    %p39 = pneg %p33
    %p40 = scmp.eq.s32.totalorder %s10, 3
    %p41 = por %p39, %p40
    %p42 = scmp.ne.s32.totalorder %s34, %s37
    %p43 = scmp.eq.s32.totalorder %s10, 0
    %p44 = por %p42, %p43
    %p45 = scmp.ne.s32.totalorder %s34, %s37
    %p46 = scmp.eq.s32.totalorder %s15, 3
    %p47 = por %p45, %p46
    %p48 = scmp.ne.s32.totalorder %s37, %s38
    %p49 = scmp.eq.s32.totalorder %s15, 0
    %p50 = por %p48, %p49
    %p51 = scmp.ne.s32.totalorder %s37, %s38
    %p52 = scmp.eq.s32.totalorder %s16, 3
    %p53 = por %p51, %p52
    %p55 = scmp.ne.s32.totalorder %s38, %s54
    %p56 = scmp.eq.s32.totalorder %s16, 0
    %p57 = por %p55, %p56
    %s59 = sadd.s32 %s58, 1
    %p62 = scmp.eq.s32.totalorder %s10, 3
    %p63 = scmp.ne.s32.totalorder %s58, %s60
    %p64 = scmp.eq.s32.totalorder %s10, 0
    %p65 = por %p63, %p64
    %p66 = scmp.ne.s32.totalorder %s58, %s60
    %p67 = scmp.eq.s32.totalorder %s15, 3
    %p68 = por %p66, %p67
    %p69 = scmp.ne.s32.totalorder %s60, %s61
    %p70 = scmp.eq.s32.totalorder %s15, 0
    %p71 = por %p69, %p70
    %p72 = scmp.ne.s32.totalorder %s60, %s61
    %p73 = scmp.eq.s32.totalorder %s16, 3
    %p74 = por %p72, %p73
    %p76 = scmp.ne.s32.totalorder %s61, %s75
    %p77 = scmp.eq.s32.totalorder %s16, 0
    %p78 = por %p76, %p77
    %s80 = sadd.s32 %s79, 1
    %p83 = scmp.eq.s32.totalorder %s10, 3
    %p84 = scmp.ne.s32.totalorder %s79, %s81
    %p85 = scmp.eq.s32.totalorder %s10, 0
    %p86 = por %p84, %p85
    %p87 = scmp.ne.s32.totalorder %s79, %s81
    %p88 = scmp.eq.s32.totalorder %s15, 3
    %p89 = por %p87, %p88
    %p90 = scmp.ne.s32.totalorder %s81, %s82
    %p91 = scmp.eq.s32.totalorder %s15, 0
    %p92 = por %p90, %p91
    %p93 = scmp.ne.s32.totalorder %s81, %s82
    %p94 = scmp.eq.s32.totalorder %s16, 3
    %p95 = por %p93, %p94
    %p97 = scmp.ne.s32.totalorder %s82, %s96
    %p98 = scmp.eq.s32.totalorder %s16, 0
    %p99 = por %p97, %p98
    %s101 = sadd.s32 %s100, 1
    %p104 = scmp.eq.s32.totalorder %s10, 3
    %p105 = scmp.ne.s32.totalorder %s100, %s102
    %p106 = scmp.eq.s32.totalorder %s10, 0
    %p107 = por %p105, %p106
    %p108 = scmp.ne.s32.totalorder %s100, %s102
    %p109 = scmp.eq.s32.totalorder %s15, 3
    %p110 = por %p108, %p109
    %p111 = scmp.ne.s32.totalorder %s102, %s103
    %p112 = scmp.eq.s32.totalorder %s15, 0
    %p113 = por %p111, %p112
    %p114 = scmp.ne.s32.totalorder %s102, %s103
    %p115 = scmp.eq.s32.totalorder %s16, 3
    %p116 = por %p114, %p115
    %p118 = scmp.ne.s32.totalorder %s103, %s117
    %p119 = scmp.eq.s32.totalorder %s16, 0
    %p120 = por %p118, %p119
    %s121 = ssub.s32 %s17, %s29
    %s122 = ssub.s32 %s18, %s25
    %s123 = sor.u32 %s121, %s122
    %p124 = scmp.eq.s32.totalorder %s123, 0
    %s126 = sadd.s32 %s125, 1
    %s127 = scalar_select %p124, %s125, %s126
    %p130 = pneg %p124
    %p131 = scmp.eq.s32.totalorder %s10, 3
    %p132 = por %p130, %p131
    %p133 = scmp.ne.s32.totalorder %s125, %s128
    %p134 = scmp.eq.s32.totalorder %s10, 0
    %p135 = por %p133, %p134
    %p136 = scmp.ne.s32.totalorder %s125, %s128
    %p137 = scmp.eq.s32.totalorder %s15, 3
    %p138 = por %p136, %p137
    %p139 = scmp.ne.s32.totalorder %s128, %s129
    %p140 = scmp.eq.s32.totalorder %s15, 0
    %p141 = por %p139, %p140
    %p142 = scmp.ne.s32.totalorder %s128, %s129
    %p143 = scmp.eq.s32.totalorder %s16, 3
    %p144 = por %p142, %p143
    %p146 = scmp.ne.s32.totalorder %s129, %s145
    %p147 = scmp.eq.s32.totalorder %s16, 0
    %p148 = por %p146, %p147
    %p149 = scmp.le.s32.totalorder 1, %s10
    %p150 = scmp.lt.s32.totalorder %s10, 5
    %p151 = pnand %p149, %p150
    %p152 = pneg %p151
    // Predicated region
    $region9: #{conv_block_forward.3} parent=5 // pred_check
      _
    $region10: #{conv_block_forward.3} parent=5 // pred_check_branch
      %154 = sbr.rel (%p151) target = $region12
    $region11: #{conv_block_forward.3} parent=5 // pred_region
      %s155 = ssub.s32 %s10, 1
      // Predicated region
      $region13: #{conv_block_forward.3} parent=11 // pred_check
        %p156 = pneg %p71
      $region14: #{conv_block_forward.3} parent=11 // pred_check_branch
        %158 = sbr.rel (%p156) target = $region16
      $region15: #{conv_block_forward.3} parent=11 // pred_region
        _
      $region16: #{conv_block_forward.3} parent=11 // pred_fallthru
        _
      // Predicated region
      $region17: #{conv_block_forward.3} parent=11 // pred_check
        %p159 = pneg %p92
      $region18: #{conv_block_forward.3} parent=11 // pred_check_branch
        %161 = sbr.rel (%p159) target = $region20
      $region19: #{conv_block_forward.3} parent=11 // pred_region
        _
      $region20: #{conv_block_forward.3} parent=11 // pred_fallthru
        _
      // Predicated region
      $region21: #{conv_block_forward.3} parent=11 // pred_check
        %p162 = pneg %p113
      $region22: #{conv_block_forward.3} parent=11 // pred_check_branch
        %164 = sbr.rel (%p162) target = $region24
      $region23: #{conv_block_forward.3} parent=11 // pred_region
        _
      $region24: #{conv_block_forward.3} parent=11 // pred_fallthru
        _
    $region12: #{conv_block_forward.3} parent=5 // pred_fallthru
      _
    %p165 = scmp.lt.s32.totalorder %s10, 4
    // Predicated region
    $region25: #{conv_block_forward.3} parent=5 // pred_check
      %p166 = pneg %p165
    $region26: #{conv_block_forward.3} parent=5 // pred_check_branch
      %168 = sbr.rel (%p166) target = $region28
    $region27: #{conv_block_forward.3} parent=5 // pred_region
      // Predicated region
      $region29: #{conv_block_forward.3} parent=27 // pred_check
        %p169 = pneg %p44
      $region30: #{conv_block_forward.3} parent=27 // pred_check_branch
        %171 = sbr.rel (%p169) target = $region32
      $region31: #{conv_block_forward.3} parent=27 // pred_region
        %p172 = scmp.lt.s32.totalorder %s17, 1
        %s173 = scalar_select %p172, %s17, 1
        %p174 = scmp.lt.s32.totalorder %s18, 1
        %s175 = scalar_select %p174, %s18, 1
        %s176 = smul.addr %s173, 2
        %s177 = sadd.s32 %s175, %s176
        %s178 = smul.addr %s177, 4
        %s179 = scalar_lea.vmem %s0, %s178
      $region32: #{conv_block_forward.3} parent=27 // pred_fallthru
        _
    $region28: #{conv_block_forward.3} parent=5 // pred_fallthru
      _
    %p180 = scmp.le.s32.totalorder 1, %s10
    %p181 = scmp.lt.s32.totalorder %s10, 5
    %p182 = pnand %p180, %p181
    %p183 = pneg %p182
    // Predicated region
    $region33: #{conv_block_forward.3} parent=5 // pred_check
      _
    $region34: #{conv_block_forward.3} parent=5 // pred_check_branch
      %185 = sbr.rel (%p182) target = $region36
    $region35: #{conv_block_forward.3} parent=5 // pred_region
      %s186 = ssub.s32 %s10, 1
      %p187 = scmp.lt.s32.totalorder %s19, 1
      %s188 = scalar_select %p187, %s19, 1
      %p189 = scmp.lt.s32.totalorder %s20, 1
      %s190 = scalar_select %p189, %s20, 1
      %s191 = smul.addr %s188, 2
      %s192 = sadd.s32 %s190, %s191
      %s193 = smul.addr %s192, 4
      %s194 = scalar_lea.vmem %s0, %s193
      %p195 = pneg %p50
      %p196 = pneg %p47
      %p197 = pneg %p71
      %p198 = pneg %p68
      %p199 = pneg %p92
      %p200 = pneg %p89
      %p201 = pneg %p113
      %p202 = pneg %p110
      %p203 = pneg %p141
      %p204 = pneg %p138
      %p205 = scmp.lt.s32.totalorder %s19, 1
      %s206 = scalar_select %p205, %s19, 1
      %p207 = scmp.lt.s32.totalorder %s20, 1
      %s208 = scalar_select %p207, %s20, 1
      %s209 = smul.addr %s206, 2
      %s210 = sadd.s32 %s208, %s209
      %s211 = smul.addr %s210, 8
      %s212 = scalar_lea.vmem %s4, %s211
      %p213 = scmp.lt.s32.totalorder %s19, 1
      %s214 = scalar_select %p213, %s19, 1
      %p215 = scmp.lt.s32.totalorder %s20, 1
      %s216 = scalar_select %p215, %s20, 1
      %s217 = smul.addr %s214, 2
      %s218 = sadd.s32 %s216, %s217
      %s219 = smul.addr %s218, 4
      %s220 = scalar_lea.vmem %s0, %s219
      %p221 = scmp.lt.s32.totalorder %s19, 1
      %s222 = scalar_select %p221, %s19, 1
      %p223 = scmp.lt.s32.totalorder %s20, 1
      %s224 = scalar_select %p223, %s20, 1
      %s225 = smul.addr %s222, 2
      %s226 = sadd.s32 %s224, %s225
      %s227 = smul.addr %s226, 8
      %s228 = scalar_lea.vmem %s4, %s227
      %v229 = vld [vmem:[%s1] sm:$0xff]
      %v230 = vld [vmem:[%s220] sm:$0xf]
      %vm231 = vcmask 31744
      %v233 = vsel %vm231, %v229, 0
      %vm235 = vcmask 1043456
      %v237 = vsel %vm235, %v230, 0
      %239 = vmatprep.subr.mxu0 0.0
      %240 = vmatpush1.msra.mxu0 0.0
      %241 = vmatprep.subr.mxu0 0.0
      %242 = vmatpush1.msra.mxu0 0.0
      %243 = vmatprep.subr.mxu0 0.0
      %244 = vmatpush1.msra.mxu0 0.0
      %245 = vmatprep.subr.mxu0 0.0
      %246 = vmatpush1.msra.mxu0 0.0
      %247 = vmatprep.subr.mxu0 0.0
      %248 = vmatpush1.msra.mxu0 0.0
      %249 = vmatprep.subr.mxu0 0.0
      %250 = vmatpush1.msra.mxu0 0.0
      %251 = vmatprep.subr.mxu0 0.0
      %252 = vmatpush1.msra.mxu0 0.0
      %253 = vmatprep.subr.mxu0 0.0
      %254 = vmatpush1.msra.mxu0 0.0
      %255 = vmatprep.subr.mxu0 0.0
      %256 = vmatpush1.msra.mxu0 0.0
      %257 = vmatprep.subr.mxu0 0.0
      %258 = vmatpush1.msra.mxu0 0.0
      %259 = vmatprep.subr.mxu0 0.0
      %260 = vmatpush1.msra.mxu0 0.0
      %261 = vmatprep.subr.mxu0 0.0
      %262 = vmatpush1.msra.mxu0 0.0
      %263 = vmatprep.subr.mxu0 0.0
      %264 = vmatpush1.msra.mxu0 0.0
      %265 = vmatprep.subr.mxu0 0.0
      %266 = vmatpush1.msra.mxu0 0.0
      %267 = vmatprep.subr.mxu0 0.0
      %268 = vmatpush1.msra.mxu0 0.0
      %269 = vmatprep.subr.mxu0 0.0
      %270 = vmatpush1.msra.mxu0 %v237
      %271 = vmatprep.subr.mxu0 0.0
      %272 = vmatpush2.msra.mxu0 0.0
      %273 = vmatprep.subr.mxu0 0.0
      %274 = vmatpush2.msra.mxu0 0.0
      %275 = vmatprep.subr.mxu0 0.0
      %276 = vmatpush2.msra.mxu0 0.0
      %277 = vmatprep.subr.mxu0 0.0
      %278 = vmatpush2.msra.mxu0 0.0
      %279 = vmatprep.subr.mxu0 0.0
      %280 = vmatpush2.msra.mxu0 0.0
      %281 = vmatprep.subr.mxu0 0.0
      %282 = vmatpush2.msra.mxu0 0.0
      %283 = vmatprep.subr.mxu0 0.0
      %284 = vmatpush2.msra.mxu0 0.0
      %285 = vmatprep.subr.mxu0 0.0
      %286 = vmatpush2.msra.mxu0 0.0
      %287 = vmatprep.subr.mxu0 0.0
      %288 = vmatpush2.msra.mxu0 0.0
      %289 = vmatprep.subr.mxu0 0.0
      %290 = vmatpush2.msra.mxu0 0.0
      %291 = vmatprep.subr.mxu0 0.0
      %292 = vmatpush2.msra.mxu0 0.0
      %293 = vmatprep.subr.mxu0 0.0
      %294 = vmatpush2.msra.mxu0 0.0
      %295 = vmatprep.subr.mxu0 0.0
      %296 = vmatpush2.msra.mxu0 0.0
      %297 = vmatprep.subr.mxu0 0.0
      %298 = vmatpush2.msra.mxu0 0.0
      %299 = vmatprep.subr.mxu0 0.0
      %300 = vmatpush2.msra.mxu0 0.0
      %301 = vmatprep.subr.mxu0 0.0
      %302 = vmatpush2.msra.mxu0 0.0
      %303 = vmatprep.mubr.f32.mxu0 0.0
      %304 = vmatmul.mubr.f32.gmra.mxu0 %v233
      %v305 = vpop.f32.mrf.mxu0
      %v306 = vadd.f32 0.0, %v305
      %v307 = vpop.f32.mrf.mxu0
      %308 = vdwg.mxu0
      %v309 = vld [vmem:[%s2] sm:$0xff]
      %311 = vset.pattern.permute.xlu0 0
      %312 = vperm.xlu0 %311, %v309
      %v313 = vpop.permute.xlu0 %312
      %v315 = vmul.f32 %v306, %v313
      %v316 = vld [vmem:[%s3] sm:$0xff]
      %318 = vset.pattern.permute.xlu0 0
      %319 = vperm.xlu0 %318, %v316
      %v320 = vpop.permute.xlu0 %319
      %v322 = vadd.f32 %v315, %v320
      %vm323 = vcmp.ge.f32.partialorder %v322, 0.0
      %v324 = vmul.f32 %v322, 0.2
      %v325 = vsel %vm323, %v322, %v324
      %326 = vst [vmem:[%s228] sm:$0xff] %v325
      %p327 = scmp.lt.s32.totalorder %s19, 1
      %s328 = scalar_select %p327, %s19, 1
      %p329 = scmp.lt.s32.totalorder %s20, 1
      %s330 = scalar_select %p329, %s20, 1
      %s331 = smul.addr %s328, 2
      %s332 = sadd.s32 %s330, %s331
      %s333 = smul.addr %s332, 8
      %s334 = scalar_lea.vmem %s4, %s333
      // Predicated region
      $region37: #{conv_block_forward.3} parent=35 // pred_check
        %p335 = pneg %p138
      $region38: #{conv_block_forward.3} parent=35 // pred_check_branch
        %337 = sbr.rel (%p335) target = $region40
      $region39: #{conv_block_forward.3} parent=35 // pred_region
        _
      $region40: #{conv_block_forward.3} parent=35 // pred_fallthru
        _
    $region36: #{conv_block_forward.3} parent=5 // pred_fallthru
      _
    %p338 = scmp.le.s32.totalorder 2, %s10
    // Predicated region
    $region41: #{conv_block_forward.3} parent=5 // pred_check
      %p339 = pneg %p338
    $region42: #{conv_block_forward.3} parent=5 // pred_check_branch
      %341 = sbr.rel (%p339) target = $region44
    $region43: #{conv_block_forward.3} parent=5 // pred_region
      %s342 = ssub.s32 %s10, 2
      // Predicated region
      $region45: #{conv_block_forward.3} parent=43 // pred_check
        %p343 = pneg %p144
      $region46: #{conv_block_forward.3} parent=43 // pred_check_branch
        %345 = sbr.rel (%p343) target = $region48
      $region47: #{conv_block_forward.3} parent=43 // pred_region
        %p346 = scmp.lt.s32.totalorder %s21, 1
        %s347 = scalar_select %p346, %s21, 1
        %p348 = scmp.lt.s32.totalorder %s22, 1
        %s349 = scalar_select %p348, %s22, 1
        %s350 = smul.addr %s347, 2
        %s351 = sadd.s32 %s349, %s350
        %s352 = smul.addr %s351, 8
        %s353 = scalar_lea.vmem %s4, %s352
      $region48: #{conv_block_forward.3} parent=43 // pred_fallthru
        _
    $region44: #{conv_block_forward.3} parent=5 // pred_fallthru
      _
  $region6: #{conv_block_forward.3} parent=0 // loop_footer
    %s14 = sadd.s32 1, %s10
  $region7: #{conv_block_forward.3} parent=0 // loop_footer_branch
    %9 = sbr.rel target = $region3
  $region8: #{conv_block_forward.3} parent=0 // loop_exit
    _

</llo_original>
